<compile_context>
chip_gen: v6e
topology: v6e:2x2x1
jax: 0.10.0
libtpu: 0.0.40
codegen_flags: <defaults>
</compile_context>

<pallas_src>
import functools

import jax
import jax.numpy as jnp
from jax import lax
from jax.experimental import pallas as pl
from jax.experimental.pallas import tpu as pltpu

LANE = 128
H1 = 256
H2 = 128


def _round_up(n, m):
    return ((n + m - 1) // m) * m


def bionet_kernel(x_ref, w1_ref, b1_ref, w2_ref, b2_ref, wh_ref, bh_ref,
                  out_ref, *, action_size):
    # fc: Linear(input_size_pad, 256) + ReLU    (bf16 x bf16 -> f32 acc)
    h1 = jnp.dot(x_ref[...], w1_ref[...],
                 preferred_element_type=jnp.float32) + b1_ref[...]
    h1 = jnp.maximum(h1, 0.0).astype(jnp.bfloat16)

    # fc: Linear(256, 128) + ReLU
    h2 = jnp.dot(h1, w2_ref[...],
                 preferred_element_type=jnp.float32) + b2_ref[...]
    h2 = jnp.maximum(h2, 0.0).astype(jnp.bfloat16)

    # fused heads: one (128, head_pad) matmul.
    #   lanes [0, A)      -> policy logits
    #   lane  A           -> value logit
    #   lanes (A, head_pad) -> zero padding (masked out below)
    logits = jnp.dot(h2, wh_ref[...],
                     preferred_element_type=jnp.float32) + bh_ref[...]

    tb, hp = logits.shape
    lane = lax.broadcasted_iota(jnp.int32, (tb, hp), 1)
    pol_mask = lane < action_size

    # masked softmax over the policy lanes
    masked = jnp.where(pol_mask, logits, jnp.float32(-1e30))
    m = jnp.max(masked, axis=-1, keepdims=True)
    e = jnp.where(pol_mask, jnp.exp(masked - m), 0.0)
    denom = jnp.sum(e, axis=-1, keepdims=True)
    policy = e * pl.reciprocal(denom, approx=True)

    # tanh value on lane `action_size`, zero elsewhere
    value = jnp.where(lane == action_size, jnp.tanh(logits), 0.0)

    # lane-dense combined output slab
    out_ref[...] = policy + value


def init_params(key, input_size, action_size):
    """Deterministic f32 init mimicking nn.Linear's U(-1/sqrt(fan_in), .)."""
    def linear(key, fan_in, fan_out):
        kw, kb = jax.random.split(key)
        bound = 1.0 / jnp.sqrt(float(fan_in))
        w = jax.random.uniform(kw, (fan_in, fan_out), jnp.float32, -bound, bound)
        b = jax.random.uniform(kb, (1, fan_out), jnp.float32, -bound, bound)
        return w, b

    k1, k2, k3, k4 = jax.random.split(key, 4)
    w1, b1 = linear(k1, input_size, H1)
    w2, b2 = linear(k2, H1, H2)
    wp, bp = linear(k3, H2, action_size)
    wv, bv = linear(k4, H2, 1)
    return dict(w1=w1, b1=b1, w2=w2, b2=b2, wp=wp, bp=bp, wv=wv, bv=bv)


def pack_params(p, input_size, action_size):
    """Pad K to 128 lanes, fuse policy+value heads, cast weights to bf16."""
    k_pad = _round_up(max(input_size, LANE), LANE)
    head_pad = _round_up(action_size + 1, LANE)

    w1 = jnp.zeros((k_pad, H1), jnp.float32).at[:input_size, :].set(p["w1"])

    wh = jnp.zeros((H2, head_pad), jnp.float32)
    wh = wh.at[:, :action_size].set(p["wp"])
    wh = wh.at[:, action_size:action_size + 1].set(p["wv"])

    bh = jnp.zeros((1, head_pad), jnp.float32)
    bh = bh.at[:, :action_size].set(p["bp"])
    bh = bh.at[:, action_size:action_size + 1].set(p["bv"])

    return dict(
        w1=w1.astype(jnp.bfloat16), b1=p["b1"],
        w2=p["w2"].astype(jnp.bfloat16), b2=p["b2"],
        wh=wh.astype(jnp.bfloat16), bh=bh,
    )


def bionet_forward(x, packed, action_size, tb=128):
    """x: (B, input_size) f32. packed: output of pack_params. Returns (policy, value)."""
    B, K = x.shape
    k_pad = packed["w1"].shape[0]
    head_pad = packed["wh"].shape[1]
    b_pad = _round_up(B, tb)

    # zero-pad batch to a tile multiple and features to 128 lanes; cast to bf16
    xp = jnp.zeros((b_pad, k_pad), jnp.bfloat16)
    xp = xp.at[:B, :K].set(x.astype(jnp.bfloat16))

    resident = lambda i: (0, 0)  # weights stay VMEM-resident across the grid

    out = pl.pallas_call(
        functools.partial(bionet_kernel, action_size=action_size),
        out_shape=jax.ShapeDtypeStruct((b_pad, head_pad), jnp.float32),
        grid=(b_pad // tb,),
        in_specs=[
            pl.BlockSpec((tb, k_pad), lambda i: (i, 0)),          # x tile
            pl.BlockSpec(packed["w1"].shape, resident),
            pl.BlockSpec(packed["b1"].shape, resident),
            pl.BlockSpec(packed["w2"].shape, resident),
            pl.BlockSpec(packed["b2"].shape, resident),
            pl.BlockSpec(packed["wh"].shape, resident),
            pl.BlockSpec(packed["bh"].shape, resident),
        ],
        out_specs=pl.BlockSpec((tb, head_pad), lambda i: (i, 0)),
        compiler_params=pltpu.CompilerParams(
            dimension_semantics=("parallel",)),
    )(xp, packed["w1"], packed["b1"], packed["w2"], packed["b2"],
      packed["wh"], packed["bh"])

    policy = out[:B, :action_size]
    value = out[:B, action_size:action_size + 1]
    return policy, value


def bionet_reference(x, p):
    """Pure-JAX f32 reference of the PyTorch forward (un-padded, un-fused)."""
    h = jnp.maximum(x @ p["w1"] + p["b1"], 0.0)
    h = jnp.maximum(h @ p["w2"] + p["b2"], 0.0)
    policy = jax.nn.softmax(h @ p["wp"] + p["bp"], axis=-1)
    value = jnp.tanh(h @ p["wv"] + p["bv"])
    return policy, value


if __name__ == "__main__":
    input_size = 32
    action_size = 8
    batch = 256   # amortizes weight DMA / launch overhead; grid=(2,) with TB=128

    key = jax.random.PRNGKey(0)
    kx, kp = jax.random.split(key)
    x = jax.random.normal(kx, (batch, input_size), dtype=jnp.float32)
    params = init_params(kp, input_size, action_size)
    packed = pack_params(params, input_size, action_size)

    policy, value = bionet_forward(x, packed, action_size, tb=128)
    jax.block_until_ready((policy, value))

    ref_policy, ref_value = bionet_reference(x, params)
    assert policy.shape == (batch, action_size)
    assert value.shape == (batch, 1)
    # bf16 weights/activations + approx reciprocal -> looser tolerances than f32
    assert jnp.allclose(policy, ref_policy, atol=2e-2, rtol=2e-2)
    assert jnp.allclose(value, ref_value, atol=2e-2, rtol=2e-2)
    assert jnp.allclose(jnp.sum(policy, axis=-1), 1.0, atol=1e-2)

    print("KERNEL_OK")
</pallas_src>

<mosaic_0001>
module attributes {stable_mosaic.version = 11 : i64} {
  func.func @bionet_kernel(%arg0: i32, %arg1: memref<128x128xbf16, #tpu.memory_space<vmem>>, %arg2: memref<128x256xbf16, #tpu.memory_space<vmem>>, %arg3: memref<1x256xf32, #tpu.memory_space<vmem>>, %arg4: memref<256x128xbf16, #tpu.memory_space<vmem>>, %arg5: memref<1x128xf32, #tpu.memory_space<vmem>>, %arg6: memref<128x128xbf16, #tpu.memory_space<vmem>>, %arg7: memref<1x128xf32, #tpu.memory_space<vmem>>, %arg8: memref<128x128xf32, #tpu.memory_space<vmem>>) attributes {dimension_semantics = [#tpu.dimension_semantics<parallel>], iteration_bounds = array<i64: 2>, scalar_prefetch = 0 : i64, scratch_operands = 0 : i64, tpu.core_type = #tpu.core_type<tc>, window_params = [{transform_indices = @transform_0, window_bounds = array<i64: 128, 128>}, {pipeline_mode = #tpu.pipeline_mode<synchronous>, transform_indices = @transform_1, window_bounds = array<i64: 128, 256>}, {pipeline_mode = #tpu.pipeline_mode<synchronous>, transform_indices = @transform_2, window_bounds = array<i64: 1, 256>}, {pipeline_mode = #tpu.pipeline_mode<synchronous>, transform_indices = @transform_3, window_bounds = array<i64: 256, 128>}, {pipeline_mode = #tpu.pipeline_mode<synchronous>, transform_indices = @transform_4, window_bounds = array<i64: 1, 128>}, {pipeline_mode = #tpu.pipeline_mode<synchronous>, transform_indices = @transform_5, window_bounds = array<i64: 128, 128>}, {pipeline_mode = #tpu.pipeline_mode<synchronous>, transform_indices = @transform_6, window_bounds = array<i64: 1, 128>}, {transform_indices = @transform_7, window_bounds = array<i64: 128, 128>}]} {
    %c0 = arith.constant 0 : index
    %c0_0 = arith.constant 0 : index
    %0 = vector.load %arg1[%c0, %c0_0] : memref<128x128xbf16, #tpu.memory_space<vmem>>, vector<128x128xbf16>
    %c0_1 = arith.constant 0 : index
    %c0_2 = arith.constant 0 : index
    %1 = vector.load %arg2[%c0_1, %c0_2] : memref<128x256xbf16, #tpu.memory_space<vmem>>, vector<128x256xbf16>
    %cst = arith.constant dense<0.000000e+00> : vector<128x256xf32>
    %2 = tpu.matmul %0, %1, %cst {dimension_numbers = #tpu.dot_dimension_numbers<[1], [0], [0], [1], [0, 0, 1, 1], [], []>} : vector<128x128xbf16>, vector<128x256xbf16>, vector<128x256xf32> -> vector<128x256xf32>
    %c0_3 = arith.constant 0 : index
    %c0_4 = arith.constant 0 : index
    %3 = vector.load %arg3[%c0_3, %c0_4] : memref<1x256xf32, #tpu.memory_space<vmem>>, vector<1x256xf32>
    %4 = vector.broadcast %3 : vector<1x256xf32> to vector<128x256xf32>
    %5 = arith.addf %2, %4 : vector<128x256xf32>
    %cst_5 = arith.constant 0.000000e+00 : f32
    %6 = vector.broadcast %cst_5 : f32 to vector<128x256xf32>
    %7 = arith.maximumf %5, %6 : vector<128x256xf32>
    %8 = arith.truncf %7 : vector<128x256xf32> to vector<128x256xbf16>
    %c0_6 = arith.constant 0 : index
    %c0_7 = arith.constant 0 : index
    %9 = vector.load %arg4[%c0_6, %c0_7] : memref<256x128xbf16, #tpu.memory_space<vmem>>, vector<256x128xbf16>
    %cst_8 = arith.constant dense<0.000000e+00> : vector<128x128xf32>
    %10 = tpu.matmul %8, %9, %cst_8 {dimension_numbers = #tpu.dot_dimension_numbers<[1], [0], [0], [1], [0, 0, 1, 1], [], []>} : vector<128x256xbf16>, vector<256x128xbf16>, vector<128x128xf32> -> vector<128x128xf32>
    %c0_9 = arith.constant 0 : index
    %c0_10 = arith.constant 0 : index
    %11 = vector.load %arg5[%c0_9, %c0_10] : memref<1x128xf32, #tpu.memory_space<vmem>>, vector<1x128xf32>
    %12 = vector.broadcast %11 : vector<1x128xf32> to vector<128x128xf32>
    %13 = arith.addf %10, %12 : vector<128x128xf32>
    %cst_11 = arith.constant 0.000000e+00 : f32
    %14 = vector.broadcast %cst_11 : f32 to vector<128x128xf32>
    %15 = arith.maximumf %13, %14 : vector<128x128xf32>
    %16 = arith.truncf %15 : vector<128x128xf32> to vector<128x128xbf16>
    %c0_12 = arith.constant 0 : index
    %c0_13 = arith.constant 0 : index
    %17 = vector.load %arg6[%c0_12, %c0_13] : memref<128x128xbf16, #tpu.memory_space<vmem>>, vector<128x128xbf16>
    %cst_14 = arith.constant dense<0.000000e+00> : vector<128x128xf32>
    %18 = tpu.matmul %16, %17, %cst_14 {dimension_numbers = #tpu.dot_dimension_numbers<[1], [0], [0], [1], [0, 0, 1, 1], [], []>} : vector<128x128xbf16>, vector<128x128xbf16>, vector<128x128xf32> -> vector<128x128xf32>
    %c0_15 = arith.constant 0 : index
    %c0_16 = arith.constant 0 : index
    %19 = vector.load %arg7[%c0_15, %c0_16] : memref<1x128xf32, #tpu.memory_space<vmem>>, vector<1x128xf32>
    %20 = vector.broadcast %19 : vector<1x128xf32> to vector<128x128xf32>
    %21 = arith.addf %18, %20 : vector<128x128xf32>
    %22 = tpu.iota {dimensions = array<i32: 1>} : vector<128x128xi32>
    %c8_i32 = arith.constant 8 : i32
    %23 = vector.broadcast %c8_i32 : i32 to vector<128x128xi32>
    %24 = arith.cmpi slt, %22, %23 : vector<128x128xi32>
    %cst_17 = arith.constant -1.000000e+30 : f32
    %25 = vector.broadcast %cst_17 : f32 to vector<128x128xf32>
    %26 = arith.select %24, %21, %25 : vector<128x128xi1>, vector<128x128xf32>
    %cst_18 = arith.constant dense<0xFF800000> : vector<128xf32>
    %27 = vector.multi_reduction <maximumf>, %26, %cst_18 [1] : vector<128x128xf32> to vector<128xf32>
    %28 = vector.shape_cast %27 : vector<128xf32> to vector<128x1xf32>
    %29 = vector.broadcast %28 : vector<128x1xf32> to vector<128x128xf32>
    %30 = arith.subf %26, %29 : vector<128x128xf32>
    %31 = math.exp %30 : vector<128x128xf32>
    %cst_19 = arith.constant 0.000000e+00 : f32
    %32 = vector.broadcast %cst_19 : f32 to vector<128x128xf32>
    %33 = arith.select %24, %31, %32 : vector<128x128xi1>, vector<128x128xf32>
    %cst_20 = arith.constant dense<0.000000e+00> : vector<128xf32>
    %34 = vector.multi_reduction <add>, %33, %cst_20 [1] : vector<128x128xf32> to vector<128xf32>
    %35 = vector.shape_cast %34 : vector<128xf32> to vector<128x1xf32>
    %36 = tpu.reciprocal %35 {approx = true} : vector<128x1xf32> -> vector<128x1xf32>
    %37 = vector.broadcast %36 : vector<128x1xf32> to vector<128x128xf32>
    %38 = arith.mulf %33, %37 : vector<128x128xf32>
    %c8_i32_21 = arith.constant 8 : i32
    %39 = vector.broadcast %c8_i32_21 : i32 to vector<128x128xi32>
    %40 = arith.cmpi eq, %22, %39 : vector<128x128xi32>
    %41 = math.tanh %21 : vector<128x128xf32>
    %cst_22 = arith.constant 0.000000e+00 : f32
    %42 = vector.broadcast %cst_22 : f32 to vector<128x128xf32>
    %43 = arith.select %40, %41, %42 : vector<128x128xi1>, vector<128x128xf32>
    %44 = arith.addf %38, %43 : vector<128x128xf32>
    %c0_23 = arith.constant 0 : index
    %c0_24 = arith.constant 0 : index
    %45 = vector.load %arg8[%c0_23, %c0_24] : memref<128x128xf32, #tpu.memory_space<vmem>>, vector<128x128xf32>
    tpu.vector_store %arg8[%c0_23, %c0_24], %44 {strides = array<i32>} : memref<128x128xf32, #tpu.memory_space<vmem>>, vector<128x128xf32>,
    return
  }
  func.func @transform_0(%arg0: i32) -> (i32, i32) {
    %c0_i32 = arith.constant 0 : i32
    %c0_i32_0 = arith.constant 0 : i32
    return %arg0, %c0_i32 : i32, i32
  }
  func.func @transform_1(%arg0: i32) -> (i32, i32) {
    %c0_i32 = arith.constant 0 : i32
    %c0_i32_0 = arith.constant 0 : i32
    %c0_i32_1 = arith.constant 0 : i32
    return %c0_i32, %c0_i32_0 : i32, i32
  }
  func.func @transform_2(%arg0: i32) -> (i32, i32) {
    %c0_i32 = arith.constant 0 : i32
    %c0_i32_0 = arith.constant 0 : i32
    %c0_i32_1 = arith.constant 0 : i32
    return %c0_i32, %c0_i32_0 : i32, i32
  }
  func.func @transform_3(%arg0: i32) -> (i32, i32) {
    %c0_i32 = arith.constant 0 : i32
    %c0_i32_0 = arith.constant 0 : i32
    %c0_i32_1 = arith.constant 0 : i32
    return %c0_i32, %c0_i32_0 : i32, i32
  }
  func.func @transform_4(%arg0: i32) -> (i32, i32) {
    %c0_i32 = arith.constant 0 : i32
    %c0_i32_0 = arith.constant 0 : i32
    %c0_i32_1 = arith.constant 0 : i32
    return %c0_i32, %c0_i32_0 : i32, i32
  }
  func.func @transform_5(%arg0: i32) -> (i32, i32) {
    %c0_i32 = arith.constant 0 : i32
    %c0_i32_0 = arith.constant 0 : i32
    %c0_i32_1 = arith.constant 0 : i32
    return %c0_i32, %c0_i32_0 : i32, i32
  }
  func.func @transform_6(%arg0: i32) -> (i32, i32) {
    %c0_i32 = arith.constant 0 : i32
    %c0_i32_0 = arith.constant 0 : i32
    %c0_i32_1 = arith.constant 0 : i32
    return %c0_i32, %c0_i32_0 : i32, i32
  }
  func.func @transform_7(%arg0: i32) -> (i32, i32) {
    %c0_i32 = arith.constant 0 : i32
    %c0_i32_0 = arith.constant 0 : i32
    return %arg0, %c0_i32 : i32, i32
  }
}

</mosaic_0001>

<llo_original>
// kernel: tpu_custom_call.1
$region0: #{tpu_custom_call.1}
  #allocation0 [shape = 'u32[]', space=smem, size = 0x4, offset = 0x4, fixed_abs, tag = 'smem constant byte address 0x4 - core index']
  #allocation1 [shape = 'u32[144,128]{1,0:T(1,128)}', space=vmem, size = 0x12000, scoped, tag = 'internal scratch']
  %s0 = inlined_call_operand.hbm [shape: bf16[256,128], index: 0, kind: input, shape index: {}]
  %s1 = inlined_call_operand.hbm [shape: bf16[128,256], index: 1, kind: input, shape index: {}]
  %s2 = inlined_call_operand.vmem [shape: f32[1,256], index: 2, kind: input, shape index: {}]
  %s3 = inlined_call_operand.hbm [shape: bf16[256,128], index: 3, kind: input, shape index: {}]
  %s4 = inlined_call_operand.vmem [shape: f32[1,128], index: 4, kind: input, shape index: {}]
  %s5 = inlined_call_operand.hbm [shape: bf16[128,128], index: 5, kind: input, shape index: {}]
  %s6 = inlined_call_operand.vmem [shape: f32[1,128], index: 6, kind: input, shape index: {}]
  %s7 = inlined_call_operand.hbm [shape: f32[256,128], index: 7, kind: output, shape index: {}]
  %s8 = sld [smem:[#allocation0]]
  $region77: #{tpu_custom_call.1} parent=0
    _
  %s10 = ssub.s32 1, %s8
  %s11 = scalar_select 0, %s10, %s8
  $region1: #{tpu_custom_call.1} parent=0
    #allocation2 [shape = 'u8[65536]{0}', space=vmem, size = 0x10000, scoped, tag = 'input window, operand 0']
    #allocation3 [shape = 's32[2]{0}', space=sflag, size = 0x8, scoped, tag = 'scoped memory for tpu_custom_call.1']
    #allocation4 [shape = 's32[2]{0}', space=sflag, size = 0x8, scoped, tag = 'scoped memory for tpu_custom_call.1']
    #allocation5 [shape = 'u8[65536]{0}', space=vmem, size = 0x10000, scoped, tag = 'input window, operand 1, single buffered']
    #allocation6 [shape = 's32[1]{0}', space=sflag, size = 0x4, scoped, tag = 'scoped memory for tpu_custom_call.1']
    #allocation7 [shape = 'u8[65536]{0}', space=vmem, size = 0x10000, scoped, tag = 'input window, operand 3, single buffered']
    #allocation8 [shape = 'u8[32768]{0}', space=vmem, size = 0x8000, scoped, tag = 'input window, operand 5, single buffered']
    #allocation9 [shape = 's32[1]{0}', space=sflag, size = 0x4, scoped, tag = 'scoped memory for tpu_custom_call.1']
    #allocation10 [shape = 'u8[131072]{0}', space=vmem, size = 0x20000, scoped, tag = 'output window, operand 0']
    %12 = vsyncpa [#allocation3], 0
    %s13 = scalar_lea.sflag [#allocation3], 1
    %14 = vsyncpa %s13, 0
    %15 = vsyncpa [#allocation6], 0
    %16 = vsyncpa [#allocation9], 0
    %17 = vsyncpa [#allocation4], 0
    %s18 = scalar_lea.sflag [#allocation4], 1
    %19 = vsyncpa %s18, 0
    loop: start=0, step=1, limit=4
    $region2: #{tpu_custom_call.1} parent=1 // loop_pre_header
      _
    $region3: #{tpu_custom_call.1} parent=1 // loop_header
      %s21 = sphi 0, %s25
      %p22 = scmp.ge.s32.totalorder %s21, 4
      %s31 = sphi 0, %s33
      %s34 = sphi 0, %s31
      %s35 = sphi 0, %s34
      %s51 = sphi 0, %s35
      %s55 = sphi 0, %s55
      %s57 = sphi 0, %s55
      %s58 = sphi 0, %s57
      %s72 = sphi 0, %s58
      %s76 = sphi 0, %s76
      %s78 = sphi 0, %s76
      %s79 = sphi 0, %s78
      %s93 = sphi 0, %s79
      %s97 = sphi 0, %s97
      %s99 = sphi 0, %s97
      %s100 = sphi 0, %s99
      %s114 = sphi 0, %s100
      %s118 = sphi 0, %s118
      %s120 = sphi 0, %s118
      %s121 = sphi 0, %s120
      %s135 = sphi 0, %s121
      %s139 = sphi 0, %s139
      %s141 = sphi 0, %s139
      %s142 = sphi 0, %s141
      %s156 = sphi 0, %s142
      %s160 = sphi 0, %s160
      %s162 = sphi 0, %s160
      %s163 = sphi 0, %s162
      %s177 = sphi 0, %s163
      %s183 = sphi 0, %s185
      %s186 = sphi 0, %s183
      %s187 = sphi 0, %s186
      %s203 = sphi 0, %s187
    $region4: #{tpu_custom_call.1} parent=1 // loop_header_branch
      %24 = sbr.rel (%p22) target = $region8
    $region5: #{tpu_custom_call.1} parent=1 // loop_body
      %s26 = ssub.s32 %s21, 1
      %s27 = ssub.s32 %s21, 2
      %s28 = sadd.s32 %s21, 1
      %s29 = ssub.s32 %s21, %s28
      %p30 = scmp.eq.s32.totalorder %s29, 0
      %s32 = sadd.s32 %s31, 1
      %s33 = scalar_select %p30, %s31, %s32
      %p36 = pneg %p30
      %p37 = scmp.eq.s32.totalorder %s21, 1
      %p38 = por %p36, %p37
      %p39 = scmp.ne.s32.totalorder %s31, %s34
      %p40 = scmp.eq.s32.totalorder %s21, 0
      %p41 = por %p39, %p40
      %p42 = scmp.ne.s32.totalorder %s31, %s34
      %p43 = scmp.eq.s32.totalorder %s26, 1
      %p44 = por %p42, %p43
      %p45 = scmp.ne.s32.totalorder %s34, %s35
      %p46 = scmp.eq.s32.totalorder %s26, 0
      %p47 = por %p45, %p46
      %p48 = scmp.ne.s32.totalorder %s34, %s35
      %p49 = scmp.eq.s32.totalorder %s27, 1
      %p50 = por %p48, %p49
      %p52 = scmp.ne.s32.totalorder %s35, %s51
      %p53 = scmp.eq.s32.totalorder %s27, 0
      %p54 = por %p52, %p53
      %s56 = sadd.s32 %s55, 1
      %p59 = scmp.eq.s32.totalorder %s21, 1
      %p60 = scmp.ne.s32.totalorder %s55, %s57
      %p61 = scmp.eq.s32.totalorder %s21, 0
      %p62 = por %p60, %p61
      %p63 = scmp.ne.s32.totalorder %s55, %s57
      %p64 = scmp.eq.s32.totalorder %s26, 1
      %p65 = por %p63, %p64
      %p66 = scmp.ne.s32.totalorder %s57, %s58
      %p67 = scmp.eq.s32.totalorder %s26, 0
      %p68 = por %p66, %p67
      %p69 = scmp.ne.s32.totalorder %s57, %s58
      %p70 = scmp.eq.s32.totalorder %s27, 1
      %p71 = por %p69, %p70
      %p73 = scmp.ne.s32.totalorder %s58, %s72
      %p74 = scmp.eq.s32.totalorder %s27, 0
      %p75 = por %p73, %p74
      %s77 = sadd.s32 %s76, 1
      %p80 = scmp.eq.s32.totalorder %s21, 1
      %p81 = scmp.ne.s32.totalorder %s76, %s78
      %p82 = scmp.eq.s32.totalorder %s21, 0
      %p83 = por %p81, %p82
      %p84 = scmp.ne.s32.totalorder %s76, %s78
      %p85 = scmp.eq.s32.totalorder %s26, 1
      %p86 = por %p84, %p85
      %p87 = scmp.ne.s32.totalorder %s78, %s79
      %p88 = scmp.eq.s32.totalorder %s26, 0
      %p89 = por %p87, %p88
      %p90 = scmp.ne.s32.totalorder %s78, %s79
      %p91 = scmp.eq.s32.totalorder %s27, 1
      %p92 = por %p90, %p91
      %p94 = scmp.ne.s32.totalorder %s79, %s93
      %p95 = scmp.eq.s32.totalorder %s27, 0
      %p96 = por %p94, %p95
      %s98 = sadd.s32 %s97, 1
      %p101 = scmp.eq.s32.totalorder %s21, 1
      %p102 = scmp.ne.s32.totalorder %s97, %s99
      %p103 = scmp.eq.s32.totalorder %s21, 0
      %p104 = por %p102, %p103
      %p105 = scmp.ne.s32.totalorder %s97, %s99
      %p106 = scmp.eq.s32.totalorder %s26, 1
      %p107 = por %p105, %p106
      %p108 = scmp.ne.s32.totalorder %s99, %s100
      %p109 = scmp.eq.s32.totalorder %s26, 0
      %p110 = por %p108, %p109
      %p111 = scmp.ne.s32.totalorder %s99, %s100
      %p112 = scmp.eq.s32.totalorder %s27, 1
      %p113 = por %p111, %p112
      %p115 = scmp.ne.s32.totalorder %s100, %s114
      %p116 = scmp.eq.s32.totalorder %s27, 0
      %p117 = por %p115, %p116
      %s119 = sadd.s32 %s118, 1
      %p122 = scmp.eq.s32.totalorder %s21, 1
      %p123 = scmp.ne.s32.totalorder %s118, %s120
      %p124 = scmp.eq.s32.totalorder %s21, 0
      %p125 = por %p123, %p124
      %p126 = scmp.ne.s32.totalorder %s118, %s120
      %p127 = scmp.eq.s32.totalorder %s26, 1
      %p128 = por %p126, %p127
      %p129 = scmp.ne.s32.totalorder %s120, %s121
      %p130 = scmp.eq.s32.totalorder %s26, 0
      %p131 = por %p129, %p130
      %p132 = scmp.ne.s32.totalorder %s120, %s121
      %p133 = scmp.eq.s32.totalorder %s27, 1
      %p134 = por %p132, %p133
      %p136 = scmp.ne.s32.totalorder %s121, %s135
      %p137 = scmp.eq.s32.totalorder %s27, 0
      %p138 = por %p136, %p137
      %s140 = sadd.s32 %s139, 1
      %p143 = scmp.eq.s32.totalorder %s21, 1
      %p144 = scmp.ne.s32.totalorder %s139, %s141
      %p145 = scmp.eq.s32.totalorder %s21, 0
      %p146 = por %p144, %p145
      %p147 = scmp.ne.s32.totalorder %s139, %s141
      %p148 = scmp.eq.s32.totalorder %s26, 1
      %p149 = por %p147, %p148
      %p150 = scmp.ne.s32.totalorder %s141, %s142
      %p151 = scmp.eq.s32.totalorder %s26, 0
      %p152 = por %p150, %p151
      %p153 = scmp.ne.s32.totalorder %s141, %s142
      %p154 = scmp.eq.s32.totalorder %s27, 1
      %p155 = por %p153, %p154
      %p157 = scmp.ne.s32.totalorder %s142, %s156
      %p158 = scmp.eq.s32.totalorder %s27, 0
      %p159 = por %p157, %p158
      %s161 = sadd.s32 %s160, 1
      %p164 = scmp.eq.s32.totalorder %s21, 1
      %p165 = scmp.ne.s32.totalorder %s160, %s162
      %p166 = scmp.eq.s32.totalorder %s21, 0
      %p167 = por %p165, %p166
      %p168 = scmp.ne.s32.totalorder %s160, %s162
      %p169 = scmp.eq.s32.totalorder %s26, 1
      %p170 = por %p168, %p169
      %p171 = scmp.ne.s32.totalorder %s162, %s163
      %p172 = scmp.eq.s32.totalorder %s26, 0
      %p173 = por %p171, %p172
      %p174 = scmp.ne.s32.totalorder %s162, %s163
      %p175 = scmp.eq.s32.totalorder %s27, 1
      %p176 = por %p174, %p175
      %p178 = scmp.ne.s32.totalorder %s163, %s177
      %p179 = scmp.eq.s32.totalorder %s27, 0
      %p180 = por %p178, %p179
      %s181 = ssub.s32 %s21, %s28
      %p182 = scmp.eq.s32.totalorder %s181, 0
      %s184 = sadd.s32 %s183, 1
      %s185 = scalar_select %p182, %s183, %s184
      %p188 = pneg %p182
      %p189 = scmp.eq.s32.totalorder %s21, 1
      %p190 = por %p188, %p189
      %p191 = scmp.ne.s32.totalorder %s183, %s186
      %p192 = scmp.eq.s32.totalorder %s21, 0
      %p193 = por %p191, %p192
      %p194 = scmp.ne.s32.totalorder %s183, %s186
      %p195 = scmp.eq.s32.totalorder %s26, 1
      %p196 = por %p194, %p195
      %p197 = scmp.ne.s32.totalorder %s186, %s187
      %p198 = scmp.eq.s32.totalorder %s26, 0
      %p199 = por %p197, %p198
      %p200 = scmp.ne.s32.totalorder %s186, %s187
      %p201 = scmp.eq.s32.totalorder %s27, 1
      %p202 = por %p200, %p201
      %p204 = scmp.ne.s32.totalorder %s187, %s203
      %p205 = scmp.eq.s32.totalorder %s27, 0
      %p206 = por %p204, %p205
      %p207 = scmp.le.s32.totalorder 1, %s21
      %p208 = scmp.lt.s32.totalorder %s21, 3
      %p209 = pnand %p207, %p208
      %p210 = pneg %p209
      // Predicated region
      $region9: #{tpu_custom_call.1} parent=5 // pred_check
        _
      $region10: #{tpu_custom_call.1} parent=5 // pred_check_branch
        %212 = sbr.rel (%p209) target = $region12
      $region11: #{tpu_custom_call.1} parent=5 // pred_region
        %s213 = ssub.s32 %s21, 1
        // Predicated region
        $region13: #{tpu_custom_call.1} parent=11 // pred_check
          %p214 = pneg %p68
        $region14: #{tpu_custom_call.1} parent=11 // pred_check_branch
          %216 = sbr.rel (%p214) target = $region16
        $region15: #{tpu_custom_call.1} parent=11 // pred_region
          %s218 = ssub.s32 2048, 2048
          %219 = vsyncadd [#allocation6], %s218
          %s220 = sshll.u32 [#allocation5], 4
          %s221 = int_to_ptr.vmem [resolvable:$true] %s220
          %226 = dma.hbm_to_vmem [thread:$0]  %s1, 2048, %s221, [#allocation6], 128, 128, 8
        $region16: #{tpu_custom_call.1} parent=11 // pred_fallthru
          _
        // Predicated region
        $region17: #{tpu_custom_call.1} parent=11 // pred_check
          %p227 = pneg %p89
        $region18: #{tpu_custom_call.1} parent=11 // pred_check_branch
          %229 = sbr.rel (%p227) target = $region20
        $region19: #{tpu_custom_call.1} parent=11 // pred_region
          _
        $region20: #{tpu_custom_call.1} parent=11 // pred_fallthru
          _
        // Predicated region
        $region21: #{tpu_custom_call.1} parent=11 // pred_check
          %p230 = pneg %p110
        $region22: #{tpu_custom_call.1} parent=11 // pred_check_branch
          %232 = sbr.rel (%p230) target = $region24
        $region23: #{tpu_custom_call.1} parent=11 // pred_region
          %s234 = ssub.s32 2048, 2048
          %235 = vsyncadd [#allocation6], %s234
          %s236 = sshll.u32 [#allocation7], 4
          %s237 = int_to_ptr.vmem [resolvable:$true] %s236
          %242 = dma.hbm_to_vmem [thread:$0]  %s3, 2048, %s237, [#allocation6], 64, 64, 4
        $region24: #{tpu_custom_call.1} parent=11 // pred_fallthru
          _
        // Predicated region
        $region25: #{tpu_custom_call.1} parent=11 // pred_check
          %p243 = pneg %p131
        $region26: #{tpu_custom_call.1} parent=11 // pred_check_branch
          %245 = sbr.rel (%p243) target = $region28
        $region27: #{tpu_custom_call.1} parent=11 // pred_region
          _
        $region28: #{tpu_custom_call.1} parent=11 // pred_fallthru
          _
        // Predicated region
        $region29: #{tpu_custom_call.1} parent=11 // pred_check
          %p246 = pneg %p152
        $region30: #{tpu_custom_call.1} parent=11 // pred_check_branch
          %248 = sbr.rel (%p246) target = $region32
        $region31: #{tpu_custom_call.1} parent=11 // pred_region
          %s250 = ssub.s32 1024, 1024
          %251 = vsyncadd [#allocation9], %s250
          %s252 = sshll.u32 [#allocation8], 4
          %s253 = int_to_ptr.vmem [resolvable:$true] %s252
          %258 = dma.hbm_to_vmem [thread:$0]  %s5, 1024, %s253, [#allocation9], 64, 64, 4
        $region32: #{tpu_custom_call.1} parent=11 // pred_fallthru
          _
        // Predicated region
        $region33: #{tpu_custom_call.1} parent=11 // pred_check
          %p259 = pneg %p173
        $region34: #{tpu_custom_call.1} parent=11 // pred_check_branch
          %261 = sbr.rel (%p259) target = $region36
        $region35: #{tpu_custom_call.1} parent=11 // pred_region
          _
        $region36: #{tpu_custom_call.1} parent=11 // pred_fallthru
          _
      $region12: #{tpu_custom_call.1} parent=5 // pred_fallthru
        _
      %p262 = scmp.lt.s32.totalorder %s21, 2
      // Predicated region
      $region37: #{tpu_custom_call.1} parent=5 // pred_check
        %p263 = pneg %p262
      $region38: #{tpu_custom_call.1} parent=5 // pred_check_branch
        %265 = sbr.rel (%p263) target = $region40
      $region39: #{tpu_custom_call.1} parent=5 // pred_region
        // Predicated region
        $region41: #{tpu_custom_call.1} parent=39 // pred_check
          %p266 = pneg %p41
        $region42: #{tpu_custom_call.1} parent=39 // pred_check_branch
          %268 = sbr.rel (%p266) target = $region44
        $region43: #{tpu_custom_call.1} parent=39 // pred_region
          %s269 = sand.u32 %s31, 1
          %s270 = scalar_lea.sflag [#allocation3], %s269
          %s271 = sand.u32 %s31, 1
          %s272 = smul.addr %s271, 64
          %s273 = scalar_lea.vmem [#allocation2], %s272
          %s274 = smul.u32 16, %s21
          %s276 = ssub.s32 1024, 1024
          %277 = vsyncadd %s270, %s276
          %s278 = smul.addr %s274, 64
          %s279 = scalar_lea.hbm %s0, %s278
          %s280 = sshll.u32 %s273, 4
          %s281 = int_to_ptr.vmem [resolvable:$true] %s280
          %286 = dma.hbm_to_vmem [thread:$0]  %s279, 1024, %s281, %s270, 64, 64, 4
        $region44: #{tpu_custom_call.1} parent=39 // pred_fallthru
          _
      $region40: #{tpu_custom_call.1} parent=5 // pred_fallthru
        _
      %p287 = scmp.le.s32.totalorder 1, %s21
      %p288 = scmp.lt.s32.totalorder %s21, 3
      %p289 = pnand %p287, %p288
      %p290 = pneg %p289
      // Predicated region
      $region45: #{tpu_custom_call.1} parent=5 // pred_check
        _
      $region46: #{tpu_custom_call.1} parent=5 // pred_check_branch
        %292 = sbr.rel (%p289) target = $region48
      $region47: #{tpu_custom_call.1} parent=5 // pred_region
        %s293 = ssub.s32 %s21, 1
        %s294 = sand.u32 %s34, 1
        %s295 = scalar_lea.sflag [#allocation3], %s294
        %s296 = sand.u32 %s34, 1
        %s297 = smul.addr %s296, 64
        %s298 = scalar_lea.vmem [#allocation2], %s297
        // Predicated region
        $region49: #{tpu_custom_call.1} parent=47 // pred_check
          %p299 = pneg %p47
        $region50: #{tpu_custom_call.1} parent=47 // pred_check_branch
          %301 = sbr.rel (%p299) target = $region52
        $region51: #{tpu_custom_call.1} parent=47 // pred_region
          %302 = dma.done %s295, 1024
        $region52: #{tpu_custom_call.1} parent=47 // pred_fallthru
          _
        // Predicated region
        $region53: #{tpu_custom_call.1} parent=47 // pred_check
          %p303 = pneg %p68
        $region54: #{tpu_custom_call.1} parent=47 // pred_check_branch
          %305 = sbr.rel (%p303) target = $region56
        $region55: #{tpu_custom_call.1} parent=47 // pred_region
          %306 = dma.done [#allocation6], 2048
        $region56: #{tpu_custom_call.1} parent=47 // pred_fallthru
          _
        // Predicated region
        $region57: #{tpu_custom_call.1} parent=47 // pred_check
          %p307 = pneg %p110
        $region58: #{tpu_custom_call.1} parent=47 // pred_check_branch
          %309 = sbr.rel (%p307) target = $region60
        $region59: #{tpu_custom_call.1} parent=47 // pred_region
          %310 = dma.done [#allocation6], 2048
        $region60: #{tpu_custom_call.1} parent=47 // pred_fallthru
          _
        // Predicated region
        $region61: #{tpu_custom_call.1} parent=47 // pred_check
          %p311 = pneg %p152
        $region62: #{tpu_custom_call.1} parent=47 // pred_check_branch
          %313 = sbr.rel (%p311) target = $region64
        $region63: #{tpu_custom_call.1} parent=47 // pred_region
          %314 = dma.done [#allocation9], 1024
        $region64: #{tpu_custom_call.1} parent=47 // pred_fallthru
          _
        %s315 = sand.u32 %s34, 1
        %s316 = scalar_lea.sflag [#allocation3], %s315
        %s317 = sand.u32 %s34, 1
        %s318 = smul.addr %s317, 64
        %s319 = scalar_lea.vmem [#allocation2], %s318
        %p320 = pneg %p47
        %p321 = pneg %p44
        %p322 = pneg %p68
        %p323 = pneg %p65
        %p324 = pneg %p89
        %p325 = pneg %p86
        %p326 = pneg %p110
        %p327 = pneg %p107
        %p328 = pneg %p131
        %p329 = pneg %p128
        %p330 = pneg %p152
        %p331 = pneg %p149
        %p332 = pneg %p173
        %p333 = pneg %p170
        %p334 = pneg %p199
        %p335 = pneg %p196
        %s336 = sand.u32 %s186, 1
        %s337 = scalar_lea.sflag [#allocation4], %s336
        %s338 = sand.u32 %s186, 1
        %s339 = smul.addr %s338, 128
        %s340 = scalar_lea.vmem [#allocation10], %s339
        %s341 = smul.u32 16, %s26
        %s342 = smul.u32 16, %s26
        %v344 = vld [vmem:[%s298] sm:$0xf]
        %v345 = vld [vmem:[%s298 + $0x4] sm:$0xf]
        %v346 = vld [vmem:[%s298 + $0x8] sm:$0xf]
        %v347 = vld [vmem:[%s298 + $0xc] sm:$0xf]
        %v348 = vld [vmem:[%s298 + $0x10] sm:$0xf]
        %v349 = vld [vmem:[%s298 + $0x14] sm:$0xf]
        %v350 = vld [vmem:[%s298 + $0x18] sm:$0xf]
        %v351 = vld [vmem:[%s298 + $0x1c] sm:$0xf]
        %v352 = vld [vmem:[%s298 + $0x20] sm:$0xf]
        %v353 = vld [vmem:[%s298 + $0x24] sm:$0xf]
        %v354 = vld [vmem:[%s298 + $0x28] sm:$0xf]
        %v355 = vld [vmem:[%s298 + $0x2c] sm:$0xf]
        %v356 = vld [vmem:[%s298 + $0x30] sm:$0xf]
        %v357 = vld [vmem:[%s298 + $0x34] sm:$0xf]
        %v358 = vld [vmem:[%s298 + $0x38] sm:$0xf]
        %v359 = vld [vmem:[%s298 + $0x3c] sm:$0xf]
        %v360 = vld [vmem:[#allocation5] sm:$0xff]
        %v361 = vld [vmem:[#allocation5 + $0x8] sm:$0xff]
        %v362 = vld [vmem:[#allocation5 + $0x10] sm:$0xff]
        %v363 = vld [vmem:[#allocation5 + $0x18] sm:$0xff]
        %v364 = vld [vmem:[#allocation5 + $0x20] sm:$0xff]
        %v365 = vld [vmem:[#allocation5 + $0x28] sm:$0xff]
        %v366 = vld [vmem:[#allocation5 + $0x30] sm:$0xff]
        %v367 = vld [vmem:[#allocation5 + $0x38] sm:$0xff]
        %v368 = vld [vmem:[#allocation5 + $0x40] sm:$0xff]
        %v369 = vld [vmem:[#allocation5 + $0x48] sm:$0xff]
        %v370 = vld [vmem:[#allocation5 + $0x50] sm:$0xff]
        %v371 = vld [vmem:[#allocation5 + $0x58] sm:$0xff]
        %v372 = vld [vmem:[#allocation5 + $0x60] sm:$0xff]
        %v373 = vld [vmem:[#allocation5 + $0x68] sm:$0xff]
        %v374 = vld [vmem:[#allocation5 + $0x70] sm:$0xff]
        %v375 = vld [vmem:[#allocation5 + $0x78] sm:$0xff]
        %v376 = vld [vmem:[%s2] sm:$0x3]
        %v378 = vlaneseq
        %v379 = vshrl.u32 %v378, 7
        %v380 = vsub.s32 0, %v379
        %v381 = vrot.slane %v376, %v380
        %v382 = vlaneseq
        %v383 = vshrl.u32 %v382, 7
        %v384 = vsub.s32 1, %v383
        %v385 = vrot.slane %v376, %v384
        %v404 = vunpack.c.l.b16 %v344
        %v405 = vunpack.c.l.b16 %v345
        %v406 = vunpack.c.l.b16 %v346
        %v407 = vunpack.c.l.b16 %v347
        %v408 = vunpack.c.l.b16 %v348
        %v409 = vunpack.c.l.b16 %v349
        %v410 = vunpack.c.l.b16 %v350
        %v411 = vunpack.c.l.b16 %v351
        %v412 = vunpack.c.l.b16 %v352
        %v413 = vunpack.c.l.b16 %v353
        %v414 = vunpack.c.l.b16 %v354
        %v415 = vunpack.c.l.b16 %v355
        %v416 = vunpack.c.l.b16 %v356
        %v417 = vunpack.c.l.b16 %v357
        %v418 = vunpack.c.l.b16 %v358
        %v419 = vunpack.c.l.b16 %v359
        %v420 = vpack.c.b16 %v405, %v404
        %v421 = vpack.c.b16 %v407, %v406
        %v422 = vpack.c.b16 %v409, %v408
        %v423 = vpack.c.b16 %v411, %v410
        %v424 = vpack.c.b16 %v413, %v412
        %v425 = vpack.c.b16 %v415, %v414
        %v426 = vpack.c.b16 %v417, %v416
        %v427 = vpack.c.b16 %v419, %v418
        %v452 = vunpack.c.l.b16 %v360
        %v453 = vunpack.c.h.b16 %v360
        %v454 = vunpack.c.l.b16 %v361
        %v455 = vunpack.c.h.b16 %v361
        %v456 = vunpack.c.l.b16 %v362
        %v457 = vunpack.c.h.b16 %v362
        %v458 = vunpack.c.l.b16 %v363
        %v459 = vunpack.c.h.b16 %v363
        %v460 = vunpack.c.l.b16 %v364
        %v461 = vunpack.c.h.b16 %v364
        %v462 = vunpack.c.l.b16 %v365
        %v463 = vunpack.c.h.b16 %v365
        %v464 = vunpack.c.l.b16 %v366
        %v465 = vunpack.c.h.b16 %v366
        %v466 = vunpack.c.l.b16 %v367
        %v467 = vunpack.c.h.b16 %v367
        %v468 = vunpack.c.l.b16 %v368
        %v469 = vunpack.c.h.b16 %v368
        %v470 = vunpack.c.l.b16 %v369
        %v471 = vunpack.c.h.b16 %v369
        %v472 = vunpack.c.l.b16 %v370
        %v473 = vunpack.c.h.b16 %v370
        %v474 = vunpack.c.l.b16 %v371
        %v475 = vunpack.c.h.b16 %v371
        %v476 = vunpack.c.l.b16 %v372
        %v477 = vunpack.c.h.b16 %v372
        %v478 = vunpack.c.l.b16 %v373
        %v479 = vunpack.c.h.b16 %v373
        %v480 = vunpack.c.l.b16 %v374
        %v481 = vunpack.c.h.b16 %v374
        %v482 = vunpack.c.l.b16 %v375
        %v483 = vunpack.c.h.b16 %v375
        %v484 = vpack.c.b16 %v454, %v452
        %v485 = vpack.c.b16 %v455, %v453
        %v486 = vpack.c.b16 %v458, %v456
        %v487 = vpack.c.b16 %v459, %v457
        %v488 = vpack.c.b16 %v462, %v460
        %v489 = vpack.c.b16 %v463, %v461
        %v490 = vpack.c.b16 %v466, %v464
        %v491 = vpack.c.b16 %v467, %v465
        %v492 = vpack.c.b16 %v470, %v468
        %v493 = vpack.c.b16 %v471, %v469
        %v494 = vpack.c.b16 %v474, %v472
        %v495 = vpack.c.b16 %v475, %v473
        %v496 = vpack.c.b16 %v478, %v476
        %v497 = vpack.c.b16 %v479, %v477
        %v498 = vpack.c.b16 %v482, %v480
        %v499 = vpack.c.b16 %v483, %v481
        %516 = vmatprep.subr.bf16.mxu0 %v499
        %517 = vmatpush1.bf16.msra.mxu0 %v498
        %518 = vmatprep.subr.bf16.mxu0 %v497
        %519 = vmatpush1.bf16.msra.mxu0 %v496
        %520 = vmatprep.subr.bf16.mxu0 %v495
        %521 = vmatpush1.bf16.msra.mxu0 %v494
        %522 = vmatprep.subr.bf16.mxu0 %v493
        %523 = vmatpush1.bf16.msra.mxu0 %v492
        %524 = vmatprep.subr.bf16.mxu0 %v491
        %525 = vmatpush1.bf16.msra.mxu0 %v490
        %526 = vmatprep.subr.bf16.mxu0 %v489
        %527 = vmatpush1.bf16.msra.mxu0 %v488
        %528 = vmatprep.subr.bf16.mxu0 %v487
        %529 = vmatpush1.bf16.msra.mxu0 %v486
        %530 = vmatprep.subr.bf16.mxu0 %v485
        %531 = vmatpush1.bf16.msra.mxu0 %v484
        %532 = vmatprep.subr.bf16.mxu0 0
        %533 = vmatpush2.bf16.msra.mxu0 0
        %534 = vmatprep.subr.bf16.mxu0 0
        %535 = vmatpush2.bf16.msra.mxu0 0
        %536 = vmatprep.subr.bf16.mxu0 0
        %537 = vmatpush2.bf16.msra.mxu0 0
        %538 = vmatprep.subr.bf16.mxu0 0
        %539 = vmatpush2.bf16.msra.mxu0 0
        %540 = vmatprep.subr.bf16.mxu0 0
        %541 = vmatpush2.bf16.msra.mxu0 0
        %542 = vmatprep.subr.bf16.mxu0 0
        %543 = vmatpush2.bf16.msra.mxu0 0
        %544 = vmatprep.subr.bf16.mxu0 0
        %545 = vmatpush2.bf16.msra.mxu0 0
        %546 = vmatprep.subr.bf16.mxu0 0
        %547 = vmatpush2.bf16.msra.mxu0 0
        %548 = vmatprep.mubr.bf16.mxu0 0
        %549 = vmatmul.mubr.bf16.gmra.mxu0 %v420
        %v550 = vpop.f32.mrf.mxu0
        %v551 = vadd.f32 %v381, %v550
        %v552 = vpop.f32.mrf.mxu0
        %v553 = vadd.f32 %v385, %v552
        %v554 = vpop.f32.mrf.mxu0
        %v555 = vadd.f32 %v381, %v554
        %v556 = vpop.f32.mrf.mxu0
        %v557 = vadd.f32 %v385, %v556
        %558 = vmatprep.mubr.bf16.mxu0 0
        %559 = vmatmul.mubr.bf16.gmra.mxu0 %v421
        %v560 = vpop.f32.mrf.mxu0
        %v561 = vadd.f32 %v381, %v560
        %v562 = vpop.f32.mrf.mxu0
        %v563 = vadd.f32 %v385, %v562
        %v564 = vpop.f32.mrf.mxu0
        %v565 = vadd.f32 %v381, %v564
        %v566 = vpop.f32.mrf.mxu0
        %v567 = vadd.f32 %v385, %v566
        %568 = vmatprep.mubr.bf16.mxu0 0
        %569 = vmatmul.mubr.bf16.gmra.mxu0 %v422
        %v570 = vpop.f32.mrf.mxu0
        %v571 = vadd.f32 %v381, %v570
        %v572 = vpop.f32.mrf.mxu0
        %v573 = vadd.f32 %v385, %v572
        %v574 = vpop.f32.mrf.mxu0
        %v575 = vadd.f32 %v381, %v574
        %v576 = vpop.f32.mrf.mxu0
        %v577 = vadd.f32 %v385, %v576
        %578 = vmatprep.mubr.bf16.mxu0 0
        %579 = vmatmul.mubr.bf16.gmra.mxu0 %v423
        %v580 = vpop.f32.mrf.mxu0
        %v581 = vadd.f32 %v381, %v580
        %v582 = vpop.f32.mrf.mxu0
        %v583 = vadd.f32 %v385, %v582
        %v584 = vpop.f32.mrf.mxu0
        %v585 = vadd.f32 %v381, %v584
        %v586 = vpop.f32.mrf.mxu0
        %v587 = vadd.f32 %v385, %v586
        %588 = vmatprep.mubr.bf16.mxu0 0
        %589 = vmatmul.mubr.bf16.gmra.mxu0 %v424
        %v590 = vpop.f32.mrf.mxu0
        %v591 = vadd.f32 %v381, %v590
        %v592 = vpop.f32.mrf.mxu0
        %v593 = vadd.f32 %v385, %v592
        %v594 = vpop.f32.mrf.mxu0
        %v595 = vadd.f32 %v381, %v594
        %v596 = vpop.f32.mrf.mxu0
        %v597 = vadd.f32 %v385, %v596
        %598 = vmatprep.mubr.bf16.mxu0 0
        %599 = vmatmul.mubr.bf16.gmra.mxu0 %v425
        %v600 = vpop.f32.mrf.mxu0
        %v601 = vadd.f32 %v381, %v600
        %v602 = vpop.f32.mrf.mxu0
        %v603 = vadd.f32 %v385, %v602
        %v604 = vpop.f32.mrf.mxu0
        %v605 = vadd.f32 %v381, %v604
        %v606 = vpop.f32.mrf.mxu0
        %v607 = vadd.f32 %v385, %v606
        %608 = vmatprep.mubr.bf16.mxu0 0
        %609 = vmatmul.mubr.bf16.gmra.mxu0 %v426
        %v610 = vpop.f32.mrf.mxu0
        %v611 = vadd.f32 %v381, %v610
        %v612 = vpop.f32.mrf.mxu0
        %v613 = vadd.f32 %v385, %v612
        %v614 = vpop.f32.mrf.mxu0
        %v615 = vadd.f32 %v381, %v614
        %v616 = vpop.f32.mrf.mxu0
        %v617 = vadd.f32 %v385, %v616
        %618 = vmatprep.mubr.bf16.mxu0 0
        %619 = vmatmul.mubr.bf16.gmra.mxu0 %v427
        %v620 = vpop.f32.mrf.mxu0
        %v621 = vadd.f32 %v381, %v620
        %v622 = vpop.f32.mrf.mxu0
        %v623 = vadd.f32 %v385, %v622
        %v624 = vpop.f32.mrf.mxu0
        %v625 = vadd.f32 %v381, %v624
        %v626 = vpop.f32.mrf.mxu0
        %v627 = vadd.f32 %v385, %v626
        %628 = vdwg.mxu0
        %v629 = vmax.f32 %v551, 0.0
        %v630 = vmax.f32 %v553, 0.0
        %v631 = vmax.f32 %v555, 0.0
        %v632 = vmax.f32 %v557, 0.0
        %v633 = vmax.f32 %v561, 0.0
        %v634 = vmax.f32 %v563, 0.0
        %v635 = vmax.f32 %v565, 0.0
        %v636 = vmax.f32 %v567, 0.0
        %v637 = vmax.f32 %v571, 0.0
        %v638 = vmax.f32 %v573, 0.0
        %v639 = vmax.f32 %v575, 0.0
        %v640 = vmax.f32 %v577, 0.0
        %v641 = vmax.f32 %v581, 0.0
        %v642 = vmax.f32 %v583, 0.0
        %v643 = vmax.f32 %v585, 0.0
        %v644 = vmax.f32 %v587, 0.0
        %v645 = vmax.f32 %v591, 0.0
        %v646 = vmax.f32 %v593, 0.0
        %v647 = vmax.f32 %v595, 0.0
        %v648 = vmax.f32 %v597, 0.0
        %v649 = vmax.f32 %v601, 0.0
        %v650 = vmax.f32 %v603, 0.0
        %v651 = vmax.f32 %v605, 0.0
        %v652 = vmax.f32 %v607, 0.0
        %v653 = vmax.f32 %v611, 0.0
        %v654 = vmax.f32 %v613, 0.0
        %v655 = vmax.f32 %v615, 0.0
        %v656 = vmax.f32 %v617, 0.0
        %v657 = vmax.f32 %v621, 0.0
        %v658 = vmax.f32 %v623, 0.0
        %v659 = vmax.f32 %v625, 0.0
        %v660 = vmax.f32 %v627, 0.0
        %v661 = vpack.c.bf16 %v631, %v629
        %v662 = vpack.c.bf16 %v632, %v630
        %v663 = vpack.c.bf16 %v635, %v633
        %v664 = vpack.c.bf16 %v636, %v634
        %v665 = vpack.c.bf16 %v639, %v637
        %v666 = vpack.c.bf16 %v640, %v638
        %v667 = vpack.c.bf16 %v643, %v641
        %v668 = vpack.c.bf16 %v644, %v642
        %v669 = vpack.c.bf16 %v647, %v645
        %v670 = vpack.c.bf16 %v648, %v646
        %v671 = vpack.c.bf16 %v651, %v649
        %v672 = vpack.c.bf16 %v652, %v650
        %v673 = vpack.c.bf16 %v655, %v653
        %v674 = vpack.c.bf16 %v656, %v654
        %v675 = vpack.c.bf16 %v659, %v657
        %v676 = vpack.c.bf16 %v660, %v658
        %v677 = vld [vmem:[#allocation7] sm:$0xf]
        %v678 = vld [vmem:[#allocation7 + $0x4] sm:$0xf]
        %v679 = vld [vmem:[#allocation7 + $0x8] sm:$0xf]
        %v680 = vld [vmem:[#allocation7 + $0xc] sm:$0xf]
        %v681 = vld [vmem:[#allocation7 + $0x10] sm:$0xf]
        %v682 = vld [vmem:[#allocation7 + $0x14] sm:$0xf]
        %v683 = vld [vmem:[#allocation7 + $0x18] sm:$0xf]
        %v684 = vld [vmem:[#allocation7 + $0x1c] sm:$0xf]
        %v685 = vld [vmem:[#allocation7 + $0x20] sm:$0xf]
        %v686 = vld [vmem:[#allocation7 + $0x24] sm:$0xf]
        %v687 = vld [vmem:[#allocation7 + $0x28] sm:$0xf]
        %v688 = vld [vmem:[#allocation7 + $0x2c] sm:$0xf]
        %v689 = vld [vmem:[#allocation7 + $0x30] sm:$0xf]
        %v690 = vld [vmem:[#allocation7 + $0x34] sm:$0xf]
        %v691 = vld [vmem:[#allocation7 + $0x38] sm:$0xf]
        %v692 = vld [vmem:[#allocation7 + $0x3c] sm:$0xf]
        %v693 = vld [vmem:[#allocation7 + $0x40] sm:$0xf]
        %v694 = vld [vmem:[#allocation7 + $0x44] sm:$0xf]
        %v695 = vld [vmem:[#allocation7 + $0x48] sm:$0xf]
        %v696 = vld [vmem:[#allocation7 + $0x4c] sm:$0xf]
        %v697 = vld [vmem:[#allocation7 + $0x50] sm:$0xf]
        %v698 = vld [vmem:[#allocation7 + $0x54] sm:$0xf]
        %v699 = vld [vmem:[#allocation7 + $0x58] sm:$0xf]
        %v700 = vld [vmem:[#allocation7 + $0x5c] sm:$0xf]
        %v701 = vld [vmem:[#allocation7 + $0x60] sm:$0xf]
        %v702 = vld [vmem:[#allocation7 + $0x64] sm:$0xf]
        %v703 = vld [vmem:[#allocation7 + $0x68] sm:$0xf]
        %v704 = vld [vmem:[#allocation7 + $0x6c] sm:$0xf]
        %v705 = vld [vmem:[#allocation7 + $0x70] sm:$0xf]
        %v706 = vld [vmem:[#allocation7 + $0x74] sm:$0xf]
        %v707 = vld [vmem:[#allocation7 + $0x78] sm:$0xf]
        %v708 = vld [vmem:[#allocation7 + $0x7c] sm:$0xf]
        %v709 = vld [vmem:[%s4] sm:$0x1]
        %v711 = vlaneseq
        %v712 = vshrl.u32 %v711, 7
        %v713 = vsub.s32 0, %v712
        %v714 = vrot.slane %v709, %v713
        %v748 = vunpack.c.l.b16 %v677
        %v749 = vunpack.c.l.b16 %v678
        %v750 = vunpack.c.l.b16 %v679
        %v751 = vunpack.c.l.b16 %v680
        %v752 = vunpack.c.l.b16 %v681
        %v753 = vunpack.c.l.b16 %v682
        %v754 = vunpack.c.l.b16 %v683
        %v755 = vunpack.c.l.b16 %v684
        %v756 = vunpack.c.l.b16 %v685
        %v757 = vunpack.c.l.b16 %v686
        %v758 = vunpack.c.l.b16 %v687
        %v759 = vunpack.c.l.b16 %v688
        %v760 = vunpack.c.l.b16 %v689
        %v761 = vunpack.c.l.b16 %v690
        %v762 = vunpack.c.l.b16 %v691
        %v763 = vunpack.c.l.b16 %v692
        %v764 = vunpack.c.l.b16 %v693
        %v765 = vunpack.c.l.b16 %v694
        %v766 = vunpack.c.l.b16 %v695
        %v767 = vunpack.c.l.b16 %v696
        %v768 = vunpack.c.l.b16 %v697
        %v769 = vunpack.c.l.b16 %v698
        %v770 = vunpack.c.l.b16 %v699
        %v771 = vunpack.c.l.b16 %v700
        %v772 = vunpack.c.l.b16 %v701
        %v773 = vunpack.c.l.b16 %v702
        %v774 = vunpack.c.l.b16 %v703
        %v775 = vunpack.c.l.b16 %v704
        %v776 = vunpack.c.l.b16 %v705
        %v777 = vunpack.c.l.b16 %v706
        %v778 = vunpack.c.l.b16 %v707
        %v779 = vunpack.c.l.b16 %v708
        %v780 = vpack.c.b16 %v749, %v748
        %v781 = vpack.c.b16 %v751, %v750
        %v782 = vpack.c.b16 %v753, %v752
        %v783 = vpack.c.b16 %v755, %v754
        %v784 = vpack.c.b16 %v757, %v756
        %v785 = vpack.c.b16 %v759, %v758
        %v786 = vpack.c.b16 %v761, %v760
        %v787 = vpack.c.b16 %v763, %v762
        %v788 = vpack.c.b16 %v765, %v764
        %v789 = vpack.c.b16 %v767, %v766
        %v790 = vpack.c.b16 %v769, %v768
        %v791 = vpack.c.b16 %v771, %v770
        %v792 = vpack.c.b16 %v773, %v772
        %v793 = vpack.c.b16 %v775, %v774
        %v794 = vpack.c.b16 %v777, %v776
        %v795 = vpack.c.b16 %v779, %v778
        %812 = vmatprep.subr.bf16.mxu0 0
        %813 = vmatpush1.bf16.msra.mxu0 %v787
        %814 = vmatprep.subr.bf16.mxu0 0
        %815 = vmatpush1.bf16.msra.mxu0 %v786
        %816 = vmatprep.subr.bf16.mxu0 0
        %817 = vmatpush1.bf16.msra.mxu0 %v785
        %818 = vmatprep.subr.bf16.mxu0 0
        %819 = vmatpush1.bf16.msra.mxu0 %v784
        %820 = vmatprep.subr.bf16.mxu0 0
        %821 = vmatpush1.bf16.msra.mxu0 %v783
        %822 = vmatprep.subr.bf16.mxu0 0
        %823 = vmatpush1.bf16.msra.mxu0 %v782
        %824 = vmatprep.subr.bf16.mxu0 0
        %825 = vmatpush1.bf16.msra.mxu0 %v781
        %826 = vmatprep.subr.bf16.mxu0 0
        %827 = vmatpush1.bf16.msra.mxu0 %v780
        %828 = vmatprep.subr.bf16.mxu0 0
        %829 = vmatpush2.bf16.msra.mxu0 %v795
        %830 = vmatprep.subr.bf16.mxu0 0
        %831 = vmatpush2.bf16.msra.mxu0 %v794
        %832 = vmatprep.subr.bf16.mxu0 0
        %833 = vmatpush2.bf16.msra.mxu0 %v793
        %834 = vmatprep.subr.bf16.mxu0 0
        %835 = vmatpush2.bf16.msra.mxu0 %v792
        %836 = vmatprep.subr.bf16.mxu0 0
        %837 = vmatpush2.bf16.msra.mxu0 %v791
        %838 = vmatprep.subr.bf16.mxu0 0
        %839 = vmatpush2.bf16.msra.mxu0 %v790
        %840 = vmatprep.subr.bf16.mxu0 0
        %841 = vmatpush2.bf16.msra.mxu0 %v789
        %842 = vmatprep.subr.bf16.mxu0 0
        %843 = vmatpush2.bf16.msra.mxu0 %v788
        %844 = vmatprep.mubr.bf16.mxu0 %v662
        %845 = vmatmul.mubr.bf16.gmra.mxu0 %v661
        %v846 = vpop.f32.mrf.mxu0
        %v847 = vadd.f32 %v714, %v846
        %v848 = vpop.f32.mrf.mxu0
        %v849 = vpop.f32.mrf.mxu0
        %v850 = vadd.f32 %v714, %v849
        %v851 = vpop.f32.mrf.mxu0
        %852 = vmatprep.mubr.bf16.mxu0 %v664
        %853 = vmatmul.mubr.bf16.gmra.mxu0 %v663
        %v854 = vpop.f32.mrf.mxu0
        %v855 = vadd.f32 %v714, %v854
        %v856 = vpop.f32.mrf.mxu0
        %v857 = vpop.f32.mrf.mxu0
        %v858 = vadd.f32 %v714, %v857
        %v859 = vpop.f32.mrf.mxu0
        %860 = vmatprep.mubr.bf16.mxu0 %v666
        %861 = vmatmul.mubr.bf16.gmra.mxu0 %v665
        %v862 = vpop.f32.mrf.mxu0
        %v863 = vadd.f32 %v714, %v862
        %v864 = vpop.f32.mrf.mxu0
        %v865 = vpop.f32.mrf.mxu0
        %v866 = vadd.f32 %v714, %v865
        %v867 = vpop.f32.mrf.mxu0
        %868 = vmatprep.mubr.bf16.mxu0 %v668
        %869 = vmatmul.mubr.bf16.gmra.mxu0 %v667
        %v870 = vpop.f32.mrf.mxu0
        %v871 = vadd.f32 %v714, %v870
        %v872 = vpop.f32.mrf.mxu0
        %v873 = vpop.f32.mrf.mxu0
        %v874 = vadd.f32 %v714, %v873
        %v875 = vpop.f32.mrf.mxu0
        %876 = vmatprep.mubr.bf16.mxu0 %v670
        %877 = vmatmul.mubr.bf16.gmra.mxu0 %v669
        %v878 = vpop.f32.mrf.mxu0
        %v879 = vadd.f32 %v714, %v878
        %v880 = vpop.f32.mrf.mxu0
        %v881 = vpop.f32.mrf.mxu0
        %v882 = vadd.f32 %v714, %v881
        %v883 = vpop.f32.mrf.mxu0
        %884 = vmatprep.mubr.bf16.mxu0 %v672
        %885 = vmatmul.mubr.bf16.gmra.mxu0 %v671
        %v886 = vpop.f32.mrf.mxu0
        %v887 = vadd.f32 %v714, %v886
        %v888 = vpop.f32.mrf.mxu0
        %v889 = vpop.f32.mrf.mxu0
        %v890 = vadd.f32 %v714, %v889
        %v891 = vpop.f32.mrf.mxu0
        %892 = vmatprep.mubr.bf16.mxu0 %v674
        %893 = vmatmul.mubr.bf16.gmra.mxu0 %v673
        %v894 = vpop.f32.mrf.mxu0
        %v895 = vadd.f32 %v714, %v894
        %v896 = vpop.f32.mrf.mxu0
        %v897 = vpop.f32.mrf.mxu0
        %v898 = vadd.f32 %v714, %v897
        %v899 = vpop.f32.mrf.mxu0
        %900 = vmatprep.mubr.bf16.mxu0 %v676
        %901 = vmatmul.mubr.bf16.gmra.mxu0 %v675
        %v902 = vpop.f32.mrf.mxu0
        %v903 = vadd.f32 %v714, %v902
        %v904 = vpop.f32.mrf.mxu0
        %v905 = vpop.f32.mrf.mxu0
        %v906 = vadd.f32 %v714, %v905
        %v907 = vpop.f32.mrf.mxu0
        %908 = vdwg.mxu0
        %v909 = vmax.f32 %v847, 0.0
        %v910 = vmax.f32 %v850, 0.0
        %v911 = vmax.f32 %v855, 0.0
        %v912 = vmax.f32 %v858, 0.0
        %v913 = vmax.f32 %v863, 0.0
        %v914 = vmax.f32 %v866, 0.0
        %v915 = vmax.f32 %v871, 0.0
        %v916 = vmax.f32 %v874, 0.0
        %v917 = vmax.f32 %v879, 0.0
        %v918 = vmax.f32 %v882, 0.0
        %v919 = vmax.f32 %v887, 0.0
        %v920 = vmax.f32 %v890, 0.0
        %v921 = vmax.f32 %v895, 0.0
        %v922 = vmax.f32 %v898, 0.0
        %v923 = vmax.f32 %v903, 0.0
        %v924 = vmax.f32 %v906, 0.0
        %v925 = vpack.c.bf16 %v910, %v909
        %v926 = vpack.c.bf16 %v912, %v911
        %v927 = vpack.c.bf16 %v914, %v913
        %v928 = vpack.c.bf16 %v916, %v915
        %v929 = vpack.c.bf16 %v918, %v917
        %v930 = vpack.c.bf16 %v920, %v919
        %v931 = vpack.c.bf16 %v922, %v921
        %v932 = vpack.c.bf16 %v924, %v923
        %v933 = vld [vmem:[#allocation8] sm:$0xf]
        %v934 = vld [vmem:[#allocation8 + $0x4] sm:$0xf]
        %v935 = vld [vmem:[#allocation8 + $0x8] sm:$0xf]
        %v936 = vld [vmem:[#allocation8 + $0xc] sm:$0xf]
        %v937 = vld [vmem:[#allocation8 + $0x10] sm:$0xf]
        %v938 = vld [vmem:[#allocation8 + $0x14] sm:$0xf]
        %v939 = vld [vmem:[#allocation8 + $0x18] sm:$0xf]
        %v940 = vld [vmem:[#allocation8 + $0x1c] sm:$0xf]
        %v941 = vld [vmem:[#allocation8 + $0x20] sm:$0xf]
        %v942 = vld [vmem:[#allocation8 + $0x24] sm:$0xf]
        %v943 = vld [vmem:[#allocation8 + $0x28] sm:$0xf]
        %v944 = vld [vmem:[#allocation8 + $0x2c] sm:$0xf]
        %v945 = vld [vmem:[#allocation8 + $0x30] sm:$0xf]
        %v946 = vld [vmem:[#allocation8 + $0x34] sm:$0xf]
        %v947 = vld [vmem:[#allocation8 + $0x38] sm:$0xf]
        %v948 = vld [vmem:[#allocation8 + $0x3c] sm:$0xf]
        %v949 = vld [vmem:[%s6] sm:$0x1]
        %v951 = vlaneseq
        %v952 = vshrl.u32 %v951, 7
        %v953 = vsub.s32 0, %v952
        %v954 = vrot.slane %v949, %v953
        %v972 = vunpack.c.l.b16 %v933
        %v973 = vunpack.c.l.b16 %v934
        %v974 = vunpack.c.l.b16 %v935
        %v975 = vunpack.c.l.b16 %v936
        %v976 = vunpack.c.l.b16 %v937
        %v977 = vunpack.c.l.b16 %v938
        %v978 = vunpack.c.l.b16 %v939
        %v979 = vunpack.c.l.b16 %v940
        %v980 = vunpack.c.l.b16 %v941
        %v981 = vunpack.c.l.b16 %v942
        %v982 = vunpack.c.l.b16 %v943
        %v983 = vunpack.c.l.b16 %v944
        %v984 = vunpack.c.l.b16 %v945
        %v985 = vunpack.c.l.b16 %v946
        %v986 = vunpack.c.l.b16 %v947
        %v987 = vunpack.c.l.b16 %v948
        %v988 = vpack.c.b16 %v973, %v972
        %v989 = vpack.c.b16 %v975, %v974
        %v990 = vpack.c.b16 %v977, %v976
        %v991 = vpack.c.b16 %v979, %v978
        %v992 = vpack.c.b16 %v981, %v980
        %v993 = vpack.c.b16 %v983, %v982
        %v994 = vpack.c.b16 %v985, %v984
        %v995 = vpack.c.b16 %v987, %v986
        %1004 = vmatprep.subr.bf16.mxu0 0
        %1005 = vmatpush1.bf16.msra.mxu0 %v995
        %1006 = vmatprep.subr.bf16.mxu0 0
        %1007 = vmatpush1.bf16.msra.mxu0 %v994
        %1008 = vmatprep.subr.bf16.mxu0 0
        %1009 = vmatpush1.bf16.msra.mxu0 %v993
        %1010 = vmatprep.subr.bf16.mxu0 0
        %1011 = vmatpush1.bf16.msra.mxu0 %v992
        %1012 = vmatprep.subr.bf16.mxu0 0
        %1013 = vmatpush1.bf16.msra.mxu0 %v991
        %1014 = vmatprep.subr.bf16.mxu0 0
        %1015 = vmatpush1.bf16.msra.mxu0 %v990
        %1016 = vmatprep.subr.bf16.mxu0 0
        %1017 = vmatpush1.bf16.msra.mxu0 %v989
        %1018 = vmatprep.subr.bf16.mxu0 0
        %1019 = vmatpush1.bf16.msra.mxu0 %v988
        %1020 = vmatprep.subr.bf16.mxu0 0
        %1021 = vmatpush2.bf16.msra.mxu0 0
        %1022 = vmatprep.subr.bf16.mxu0 0
        %1023 = vmatpush2.bf16.msra.mxu0 0
        %1024 = vmatprep.subr.bf16.mxu0 0
        %1025 = vmatpush2.bf16.msra.mxu0 0
        %1026 = vmatprep.subr.bf16.mxu0 0
        %1027 = vmatpush2.bf16.msra.mxu0 0
        %1028 = vmatprep.subr.bf16.mxu0 0
        %1029 = vmatpush2.bf16.msra.mxu0 0
        %1030 = vmatprep.subr.bf16.mxu0 0
        %1031 = vmatpush2.bf16.msra.mxu0 0
        %1032 = vmatprep.subr.bf16.mxu0 0
        %1033 = vmatpush2.bf16.msra.mxu0 0
        %1034 = vmatprep.subr.bf16.mxu0 0
        %1035 = vmatpush2.bf16.msra.mxu0 0
        %1036 = vmatprep.mubr.bf16.mxu0 0
        %1037 = vmatmul.mubr.bf16.gmra.mxu0 %v925
        %v1038 = vpop.f32.mrf.mxu0
        %v1039 = vadd.f32 %v954, %v1038
        %v1040 = vpop.f32.mrf.mxu0
        %v1041 = vpop.f32.mrf.mxu0
        %v1042 = vadd.f32 %v954, %v1041
        %v1043 = vpop.f32.mrf.mxu0
        %1044 = vmatprep.mubr.bf16.mxu0 0
        %1045 = vmatmul.mubr.bf16.gmra.mxu0 %v926
        %v1046 = vpop.f32.mrf.mxu0
        %v1047 = vadd.f32 %v954, %v1046
        %v1048 = vpop.f32.mrf.mxu0
        %v1049 = vpop.f32.mrf.mxu0
        %v1050 = vadd.f32 %v954, %v1049
        %v1051 = vpop.f32.mrf.mxu0
        %1052 = vmatprep.mubr.bf16.mxu0 0
        %1053 = vmatmul.mubr.bf16.gmra.mxu0 %v927
        %v1054 = vpop.f32.mrf.mxu0
        %v1055 = vadd.f32 %v954, %v1054
        %v1056 = vpop.f32.mrf.mxu0
        %v1057 = vpop.f32.mrf.mxu0
        %v1058 = vadd.f32 %v954, %v1057
        %v1059 = vpop.f32.mrf.mxu0
        %1060 = vmatprep.mubr.bf16.mxu0 0
        %1061 = vmatmul.mubr.bf16.gmra.mxu0 %v928
        %v1062 = vpop.f32.mrf.mxu0
        %v1063 = vadd.f32 %v954, %v1062
        %v1064 = vpop.f32.mrf.mxu0
        %v1065 = vpop.f32.mrf.mxu0
        %v1066 = vadd.f32 %v954, %v1065
        %v1067 = vpop.f32.mrf.mxu0
        %1068 = vmatprep.mubr.bf16.mxu0 0
        %1069 = vmatmul.mubr.bf16.gmra.mxu0 %v929
        %v1070 = vpop.f32.mrf.mxu0
        %v1071 = vadd.f32 %v954, %v1070
        %v1072 = vpop.f32.mrf.mxu0
        %v1073 = vpop.f32.mrf.mxu0
        %v1074 = vadd.f32 %v954, %v1073
        %v1075 = vpop.f32.mrf.mxu0
        %1076 = vmatprep.mubr.bf16.mxu0 0
        %1077 = vmatmul.mubr.bf16.gmra.mxu0 %v930
        %v1078 = vpop.f32.mrf.mxu0
        %v1079 = vadd.f32 %v954, %v1078
        %v1080 = vpop.f32.mrf.mxu0
        %v1081 = vpop.f32.mrf.mxu0
        %v1082 = vadd.f32 %v954, %v1081
        %v1083 = vpop.f32.mrf.mxu0
        %1084 = vmatprep.mubr.bf16.mxu0 0
        %1085 = vmatmul.mubr.bf16.gmra.mxu0 %v931
        %v1086 = vpop.f32.mrf.mxu0
        %v1087 = vadd.f32 %v954, %v1086
        %v1088 = vpop.f32.mrf.mxu0
        %v1089 = vpop.f32.mrf.mxu0
        %v1090 = vadd.f32 %v954, %v1089
        %v1091 = vpop.f32.mrf.mxu0
        %1092 = vmatprep.mubr.bf16.mxu0 0
        %1093 = vmatmul.mubr.bf16.gmra.mxu0 %v932
        %v1094 = vpop.f32.mrf.mxu0
        %v1095 = vadd.f32 %v954, %v1094
        %v1096 = vpop.f32.mrf.mxu0
        %v1097 = vpop.f32.mrf.mxu0
        %v1098 = vadd.f32 %v954, %v1097
        %v1099 = vpop.f32.mrf.mxu0
        %1100 = vdwg.mxu0
        %v1101 = vlaneseq
        %v1102 = vand.u32 %v1101, 127
        %vm1103 = vcmp.lt.s32.totalorder %v1102, 8
        %v1104 = vsel %vm1103, %v1039, -1e+30
        %v1105 = vsel %vm1103, %v1042, -1e+30
        %v1106 = vsel %vm1103, %v1047, -1e+30
        %v1107 = vsel %vm1103, %v1050, -1e+30
        %v1108 = vsel %vm1103, %v1055, -1e+30
        %v1109 = vsel %vm1103, %v1058, -1e+30
        %v1110 = vsel %vm1103, %v1063, -1e+30
        %v1111 = vsel %vm1103, %v1066, -1e+30
        %v1112 = vsel %vm1103, %v1071, -1e+30
        %v1113 = vsel %vm1103, %v1074, -1e+30
        %v1114 = vsel %vm1103, %v1079, -1e+30
        %v1115 = vsel %vm1103, %v1082, -1e+30
        %v1116 = vsel %vm1103, %v1087, -1e+30
        %v1117 = vsel %vm1103, %v1090, -1e+30
        %v1118 = vsel %vm1103, %v1095, -1e+30
        %v1119 = vsel %vm1103, %v1098, -1e+30
        %1120 = vmax.xlane.f32.xlu0 %v1104
        %v1121 = vpop.xlane.xlu0 %1120
        %1122 = vmax.xlane.f32.xlu0 %v1105
        %v1123 = vpop.xlane.xlu0 %1122
        %1124 = vmax.xlane.f32.xlu0 %v1106
        %v1125 = vpop.xlane.xlu0 %1124
        %1126 = vmax.xlane.f32.xlu0 %v1107
        %v1127 = vpop.xlane.xlu0 %1126
        %1128 = vmax.xlane.f32.xlu0 %v1108
        %v1129 = vpop.xlane.xlu0 %1128
        %1130 = vmax.xlane.f32.xlu0 %v1109
        %v1131 = vpop.xlane.xlu0 %1130
        %1132 = vmax.xlane.f32.xlu0 %v1110
        %v1133 = vpop.xlane.xlu0 %1132
        %1134 = vmax.xlane.f32.xlu0 %v1111
        %v1135 = vpop.xlane.xlu0 %1134
        %1136 = vmax.xlane.f32.xlu0 %v1112
        %v1137 = vpop.xlane.xlu0 %1136
        %1138 = vmax.xlane.f32.xlu0 %v1113
        %v1139 = vpop.xlane.xlu0 %1138
        %1140 = vmax.xlane.f32.xlu0 %v1114
        %v1141 = vpop.xlane.xlu0 %1140
        %1142 = vmax.xlane.f32.xlu0 %v1115
        %v1143 = vpop.xlane.xlu0 %1142
        %1144 = vmax.xlane.f32.xlu0 %v1116
        %v1145 = vpop.xlane.xlu0 %1144
        %1146 = vmax.xlane.f32.xlu0 %v1117
        %v1147 = vpop.xlane.xlu0 %1146
        %1148 = vmax.xlane.f32.xlu0 %v1118
        %v1149 = vpop.xlane.xlu0 %1148
        %1150 = vmax.xlane.f32.xlu0 %v1119
        %v1151 = vpop.xlane.xlu0 %1150
        %v1152 = vsub.f32 %v1104, %v1121
        %v1153 = vsub.f32 %v1105, %v1123
        %v1154 = vsub.f32 %v1106, %v1125
        %v1155 = vsub.f32 %v1107, %v1127
        %v1156 = vsub.f32 %v1108, %v1129
        %v1157 = vsub.f32 %v1109, %v1131
        %v1158 = vsub.f32 %v1110, %v1133
        %v1159 = vsub.f32 %v1111, %v1135
        %v1160 = vsub.f32 %v1112, %v1137
        %v1161 = vsub.f32 %v1113, %v1139
        %v1162 = vsub.f32 %v1114, %v1141
        %v1163 = vsub.f32 %v1115, %v1143
        %v1164 = vsub.f32 %v1116, %v1145
        %v1165 = vsub.f32 %v1117, %v1147
        %v1166 = vsub.f32 %v1118, %v1149
        %v1167 = vsub.f32 %v1119, %v1151
        %v1168 = vmul.f32 %v1152, 1.442695
        %v1169 = vpow.pop %v1168
        %v1170 = vmul.f32 %v1153, 1.442695
        %v1171 = vpow.pop %v1170
        %v1172 = vmul.f32 %v1154, 1.442695
        %v1173 = vpow.pop %v1172
        %v1174 = vmul.f32 %v1155, 1.442695
        %v1175 = vpow.pop %v1174
        %v1176 = vmul.f32 %v1156, 1.442695
        %v1177 = vpow.pop %v1176
        %v1178 = vmul.f32 %v1157, 1.442695
        %v1179 = vpow.pop %v1178
        %v1180 = vmul.f32 %v1158, 1.442695
        %v1181 = vpow.pop %v1180
        %v1182 = vmul.f32 %v1159, 1.442695
        %v1183 = vpow.pop %v1182
        %v1184 = vmul.f32 %v1160, 1.442695
        %v1185 = vpow.pop %v1184
        %v1186 = vmul.f32 %v1161, 1.442695
        %v1187 = vpow.pop %v1186
        %v1188 = vmul.f32 %v1162, 1.442695
        %v1189 = vpow.pop %v1188
        %v1190 = vmul.f32 %v1163, 1.442695
        %v1191 = vpow.pop %v1190
        %v1192 = vmul.f32 %v1164, 1.442695
        %v1193 = vpow.pop %v1192
        %v1194 = vmul.f32 %v1165, 1.442695
        %v1195 = vpow.pop %v1194
        %v1196 = vmul.f32 %v1166, 1.442695
        %v1197 = vpow.pop %v1196
        %v1198 = vmul.f32 %v1167, 1.442695
        %v1199 = vpow.pop %v1198
        %v1200 = vsel %vm1103, %v1169, 0.0
        %v1201 = vsel %vm1103, %v1171, 0.0
        %v1202 = vsel %vm1103, %v1173, 0.0
        %v1203 = vsel %vm1103, %v1175, 0.0
        %v1204 = vsel %vm1103, %v1177, 0.0
        %v1205 = vsel %vm1103, %v1179, 0.0
        %v1206 = vsel %vm1103, %v1181, 0.0
        %v1207 = vsel %vm1103, %v1183, 0.0
        %v1208 = vsel %vm1103, %v1185, 0.0
        %v1209 = vsel %vm1103, %v1187, 0.0
        %v1210 = vsel %vm1103, %v1189, 0.0
        %v1211 = vsel %vm1103, %v1191, 0.0
        %v1212 = vsel %vm1103, %v1193, 0.0
        %v1213 = vsel %vm1103, %v1195, 0.0
        %v1214 = vsel %vm1103, %v1197, 0.0
        %v1215 = vsel %vm1103, %v1199, 0.0
        %1216 = vadd.xlane.f32.xlu0 %v1200
        %v1217 = vpop.xlane.xlu0 %1216
        %1218 = vadd.xlane.f32.xlu0 %v1201
        %v1219 = vpop.xlane.xlu0 %1218
        %1220 = vadd.xlane.f32.xlu0 %v1202
        %v1221 = vpop.xlane.xlu0 %1220
        %1222 = vadd.xlane.f32.xlu0 %v1203
        %v1223 = vpop.xlane.xlu0 %1222
        %1224 = vadd.xlane.f32.xlu0 %v1204
        %v1225 = vpop.xlane.xlu0 %1224
        %1226 = vadd.xlane.f32.xlu0 %v1205
        %v1227 = vpop.xlane.xlu0 %1226
        %1228 = vadd.xlane.f32.xlu0 %v1206
        %v1229 = vpop.xlane.xlu0 %1228
        %1230 = vadd.xlane.f32.xlu0 %v1207
        %v1231 = vpop.xlane.xlu0 %1230
        %1232 = vadd.xlane.f32.xlu0 %v1208
        %v1233 = vpop.xlane.xlu0 %1232
        %1234 = vadd.xlane.f32.xlu0 %v1209
        %v1235 = vpop.xlane.xlu0 %1234
        %1236 = vadd.xlane.f32.xlu0 %v1210
        %v1237 = vpop.xlane.xlu0 %1236
        %1238 = vadd.xlane.f32.xlu0 %v1211
        %v1239 = vpop.xlane.xlu0 %1238
        %1240 = vadd.xlane.f32.xlu0 %v1212
        %v1241 = vpop.xlane.xlu0 %1240
        %1242 = vadd.xlane.f32.xlu0 %v1213
        %v1243 = vpop.xlane.xlu0 %1242
        %1244 = vadd.xlane.f32.xlu0 %v1214
        %v1245 = vpop.xlane.xlu0 %1244
        %1246 = vadd.xlane.f32.xlu0 %v1215
        %v1247 = vpop.xlane.xlu0 %1246
        %v1248 = vrcp.pop %v1217
        %v1249 = vrcp.pop %v1219
        %v1250 = vrcp.pop %v1221
        %v1251 = vrcp.pop %v1223
        %v1252 = vrcp.pop %v1225
        %v1253 = vrcp.pop %v1227
        %v1254 = vrcp.pop %v1229
        %v1255 = vrcp.pop %v1231
        %v1256 = vrcp.pop %v1233
        %v1257 = vrcp.pop %v1235
        %v1258 = vrcp.pop %v1237
        %v1259 = vrcp.pop %v1239
        %v1260 = vrcp.pop %v1241
        %v1261 = vrcp.pop %v1243
        %v1262 = vrcp.pop %v1245
        %v1263 = vrcp.pop %v1247
        %v1264 = vmul.f32 %v1200, %v1248
        %v1265 = vmul.f32 %v1201, %v1249
        %v1266 = vmul.f32 %v1202, %v1250
        %v1267 = vmul.f32 %v1203, %v1251
        %v1268 = vmul.f32 %v1204, %v1252
        %v1269 = vmul.f32 %v1205, %v1253
        %v1270 = vmul.f32 %v1206, %v1254
        %v1271 = vmul.f32 %v1207, %v1255
        %v1272 = vmul.f32 %v1208, %v1256
        %v1273 = vmul.f32 %v1209, %v1257
        %v1274 = vmul.f32 %v1210, %v1258
        %v1275 = vmul.f32 %v1211, %v1259
        %v1276 = vmul.f32 %v1212, %v1260
        %v1277 = vmul.f32 %v1213, %v1261
        %v1278 = vmul.f32 %v1214, %v1262
        %v1279 = vmul.f32 %v1215, %v1263
        %vm1280 = vcmp.eq.s32.totalorder %v1102, 8
        %v1281 = vtanh.pop %v1039
        %v1282 = vtanh.pop %v1042
        %v1283 = vtanh.pop %v1047
        %v1284 = vtanh.pop %v1050
        %v1285 = vtanh.pop %v1055
        %v1286 = vtanh.pop %v1058
        %v1287 = vtanh.pop %v1063
        %v1288 = vtanh.pop %v1066
        %v1289 = vtanh.pop %v1071
        %v1290 = vtanh.pop %v1074
        %v1291 = vtanh.pop %v1079
        %v1292 = vtanh.pop %v1082
        %v1293 = vtanh.pop %v1087
        %v1294 = vtanh.pop %v1090
        %v1295 = vtanh.pop %v1095
        %v1296 = vtanh.pop %v1098
        %v1297 = vsel %vm1280, %v1281, 0.0
        %v1298 = vsel %vm1280, %v1282, 0.0
        %v1299 = vsel %vm1280, %v1283, 0.0
        %v1300 = vsel %vm1280, %v1284, 0.0
        %v1301 = vsel %vm1280, %v1285, 0.0
        %v1302 = vsel %vm1280, %v1286, 0.0
        %v1303 = vsel %vm1280, %v1287, 0.0
        %v1304 = vsel %vm1280, %v1288, 0.0
        %v1305 = vsel %vm1280, %v1289, 0.0
        %v1306 = vsel %vm1280, %v1290, 0.0
        %v1307 = vsel %vm1280, %v1291, 0.0
        %v1308 = vsel %vm1280, %v1292, 0.0
        %v1309 = vsel %vm1280, %v1293, 0.0
        %v1310 = vsel %vm1280, %v1294, 0.0
        %v1311 = vsel %vm1280, %v1295, 0.0
        %v1312 = vsel %vm1280, %v1296, 0.0
        %v1313 = vadd.f32 %v1264, %v1297
        %v1314 = vadd.f32 %v1265, %v1298
        %v1315 = vadd.f32 %v1266, %v1299
        %v1316 = vadd.f32 %v1267, %v1300
        %v1317 = vadd.f32 %v1268, %v1301
        %v1318 = vadd.f32 %v1269, %v1302
        %v1319 = vadd.f32 %v1270, %v1303
        %v1320 = vadd.f32 %v1271, %v1304
        %v1321 = vadd.f32 %v1272, %v1305
        %v1322 = vadd.f32 %v1273, %v1306
        %v1323 = vadd.f32 %v1274, %v1307
        %v1324 = vadd.f32 %v1275, %v1308
        %v1325 = vadd.f32 %v1276, %v1309
        %v1326 = vadd.f32 %v1277, %v1310
        %v1327 = vadd.f32 %v1278, %v1311
        %v1328 = vadd.f32 %v1279, %v1312
        %1329 = vst [vmem:[%s340] sm:$0xff] %v1313
        %1330 = vst [vmem:[%s340 + $0x8] sm:$0xff] %v1314
        %1331 = vst [vmem:[%s340 + $0x10] sm:$0xff] %v1315
        %1332 = vst [vmem:[%s340 + $0x18] sm:$0xff] %v1316
        %1333 = vst [vmem:[%s340 + $0x20] sm:$0xff] %v1317
        %1334 = vst [vmem:[%s340 + $0x28] sm:$0xff] %v1318
        %1335 = vst [vmem:[%s340 + $0x30] sm:$0xff] %v1319
        %1336 = vst [vmem:[%s340 + $0x38] sm:$0xff] %v1320
        %1337 = vst [vmem:[%s340 + $0x40] sm:$0xff] %v1321
        %1338 = vst [vmem:[%s340 + $0x48] sm:$0xff] %v1322
        %1339 = vst [vmem:[%s340 + $0x50] sm:$0xff] %v1323
        %1340 = vst [vmem:[%s340 + $0x58] sm:$0xff] %v1324
        %1341 = vst [vmem:[%s340 + $0x60] sm:$0xff] %v1325
        %1342 = vst [vmem:[%s340 + $0x68] sm:$0xff] %v1326
        %1343 = vst [vmem:[%s340 + $0x70] sm:$0xff] %v1327
        %1344 = vst [vmem:[%s340 + $0x78] sm:$0xff] %v1328
        %s1345 = sand.u32 %s186, 1
        %s1346 = scalar_lea.sflag [#allocation4], %s1345
        %s1347 = sand.u32 %s186, 1
        %s1348 = smul.addr %s1347, 128
        %s1349 = scalar_lea.vmem [#allocation10], %s1348
        // Predicated region
        $region65: #{tpu_custom_call.1} parent=47 // pred_check
          %p1350 = pneg %p196
        $region66: #{tpu_custom_call.1} parent=47 // pred_check_branch
          %1352 = sbr.rel (%p1350) target = $region68
        $region67: #{tpu_custom_call.1} parent=47 // pred_region
          %s1353 = smul.u32 16, %s26
          %s1355 = ssub.s32 2048, 2048
          %1356 = vsyncadd %s1346, %s1355
          %s1357 = smul.addr %s1353, 128
          %s1358 = scalar_lea.hbm %s7, %s1357
          %s1359 = sshll.u32 %s1349, 4
          %s1360 = int_to_ptr.vmem [resolvable:$true] %s1359
          %1365 = dma.vmem_to_hbm [thread:$0]  %s1360, 2048, %s1358, %s1346, 128, 128, 8
        $region68: #{tpu_custom_call.1} parent=47 // pred_fallthru
          _
      $region48: #{tpu_custom_call.1} parent=5 // pred_fallthru
        _
      %p1366 = scmp.le.s32.totalorder 2, %s21
      // Predicated region
      $region69: #{tpu_custom_call.1} parent=5 // pred_check
        %p1367 = pneg %p1366
      $region70: #{tpu_custom_call.1} parent=5 // pred_check_branch
        %1369 = sbr.rel (%p1367) target = $region72
      $region71: #{tpu_custom_call.1} parent=5 // pred_region
        %s1370 = ssub.s32 %s21, 2
        // Predicated region
        $region73: #{tpu_custom_call.1} parent=71 // pred_check
          %p1371 = pneg %p202
        $region74: #{tpu_custom_call.1} parent=71 // pred_check_branch
          %1373 = sbr.rel (%p1371) target = $region76
        $region75: #{tpu_custom_call.1} parent=71 // pred_region
          %s1374 = sand.u32 %s187, 1
          %s1375 = scalar_lea.sflag [#allocation4], %s1374
          %s1376 = sand.u32 %s187, 1
          %s1377 = smul.addr %s1376, 128
          %s1378 = scalar_lea.vmem [#allocation10], %s1377
          %1379 = dma.done %s1375, 2048
        $region76: #{tpu_custom_call.1} parent=71 // pred_fallthru
          _
      $region72: #{tpu_custom_call.1} parent=5 // pred_fallthru
        _
    $region6: #{tpu_custom_call.1} parent=1 // loop_footer
      %s25 = sadd.s32 1, %s21
    $region7: #{tpu_custom_call.1} parent=1 // loop_footer_branch
      %20 = sbr.rel target = $region3
    $region8: #{tpu_custom_call.1} parent=1 // loop_exit
      _
    %1380 = vsyncpa [#allocation3], 1
    %s1381 = scalar_lea.sflag [#allocation3], 1
    %1382 = vsyncpa %s1381, 1
    %1383 = vsyncpa [#allocation6], 1
    %1384 = vsyncpa [#allocation9], 1
    %1385 = vsyncpa [#allocation4], 1
    %s1386 = scalar_lea.sflag [#allocation4], 1
    %1387 = vsyncpa %s1386, 1

</llo_original>
